<compile_context>
chip_gen: v7x
topology: tpu7x:2x2x1
jax: 0.10.0
libtpu: 0.0.40
codegen_flags: <defaults>
</compile_context>

<pallas_src>
from functools import partial  # noqa: F401

import jax
import jax.numpy as jnp
from jax.experimental import pallas as pl
from jax.experimental.pallas import tpu as pltpu


def _round_up(n, m):
    return ((n + m - 1) // m) * m


def _pick_batch_tile(b):
    """Full batch if small/odd; otherwise a multiple of 8 (sublane width), capped at 128."""
    if b <= 8 or b % 8 != 0:
        return b
    bt = 8
    while b % (2 * bt) == 0 and 2 * bt <= 128:
        bt *= 2
    return bt


# ---------------------------------------------------------------------------
# Fused kernel: one-hot "gather" -> (conv + adaptive-avg-pool) matmul -> PReLU -> decoder
# ---------------------------------------------------------------------------
def textcnn_fused_kernel(ids_rep_ref, vpat_ref, h_ref, bconv_ref, wdec_ref,
                         bdec_ref, alpha_ref, out_ref):
    """
    ids_rep_ref: (Bt, L*V) int32   token id at position t, repeated V times along lanes
    vpat_ref:    (1,  L*V) int32   [0..V-1] tiled L times
    h_ref:       (L*V, Cp)         embedding+conv+pool folded weight (Cp = 128-padded)
    bconv_ref:   (1, Cp)  f32      conv biases (zero padded)
    wdec_ref:    (Cp, Op)          decoder weight (pre-transposed, zero padded)
    bdec_ref:    (1, Op)  f32      decoder bias (zero padded)
    alpha_ref:   (1, 1)   f32      PReLU slope (SMEM scalar)
    out_ref:     (Bt, Op) f32      lane-dense logits slab
    """
    mm_dtype = h_ref.dtype

    # Embedding gather + Conv1d branches + AdaptiveAvgPool1d(1), all as ONE MXU contraction:
    #   onehot[b, t*V + v] = (ids[b, t] == v);  pooled = onehot @ H  (f32 accumulate).
    onehot = jnp.where(ids_rep_ref[...] == vpat_ref[...],
                       jnp.float32(1), jnp.float32(0)).astype(mm_dtype)
    pooled = jnp.dot(onehot, h_ref[...], preferred_element_type=jnp.float32)

    # Conv bias added after pooling (mean of a constant is the constant).
    pooled = pooled + bconv_ref[...]

    # PReLU (single shared parameter), f32 element-wise math (v5e-safe).
    alpha = alpha_ref[0, 0]
    act = jnp.where(pooled > 0, pooled, alpha * pooled)

    # TODO(synk): nn.Dropout(0.5) is identity in eval mode; training-mode random masking
    #             (pltpu.prng_seed / prng_random_bits) not implemented.

    # Decoder: (Bt, Cp) @ (Cp, Op) + bias -> lane-dense 128-wide store.
    out_ref[...] = (
        jnp.dot(act.astype(mm_dtype), wdec_ref[...],
                preferred_element_type=jnp.float32)
        + bdec_ref[...]
    )


# ---------------------------------------------------------------------------
# One-time parameter preparation (off the hot path)
# ---------------------------------------------------------------------------
def prepare_textcnn_params(params, total_len, matmul_dtype=jnp.float32):
    """Fold PyTorch-layout TextCNN parameters into the fused-kernel operands.

    params: embedding (V, E); convs = [(w (C, E, K), b (C,)), ...];
            prelu_alpha (); dec_w (3, sum C); dec_b (3,)
    total_len: L = premise_len + hypothesis_len (the conv/pool fold depends on L).
    """
    emb = jnp.asarray(params["embedding"], jnp.float32)              # (V, E)
    V, E = emb.shape
    L = int(total_len)

    # ---- pool-before-matmul fold: Conv1d_i + mean_t  ->  G_i (L, E, C_i) ----
    g_list, b_list = [], []
    for (w, b) in params["convs"]:
        w = jnp.asarray(w, jnp.float32)                              # (C, E, K) torch layout
        C, _, K = w.shape
        Lout = L - K + 1
        wt = jnp.transpose(w, (2, 1, 0))                             # (K, E, C)
        g = jnp.zeros((L, E, C), jnp.float32)
        for k in range(K):                                           # tap k covers positions k..k+Lout-1
            g = g.at[k:k + Lout].add(wt[k][None])
        g_list.append(g / Lout)
        b_list.append(jnp.asarray(b, jnp.float32))
    g_all = jnp.concatenate(g_list, axis=-1)                         # (L, E, Ct)
    b_all = jnp.concatenate(b_list, axis=-1)                         # (Ct,)
    Ct = g_all.shape[-1]

    # ---- lane-dense (128) padding for both matmul outputs ----
    Cp = _round_up(Ct, 128)
    n_out = int(jnp.asarray(params["dec_b"]).shape[0])
    Op = _round_up(n_out, 128)

    g_pad = jnp.zeros((L, E, Cp), jnp.float32).at[:, :, :Ct].set(g_all)
    bconv = jnp.zeros((1, Cp), jnp.float32).at[0, :Ct].set(b_all)

    # ---- fold the embedding table into the conv/pool weight ----
    # H[t*V + v, c] = sum_e emb[v, e] * G[t, e, c]
    # TODO(synk): for large vocabularies this fold is too big; switch to an in-kernel row
    #             gather (emb in VMEM + ids in SMEM) feeding a (B, L*E) @ (L*E, Cp) matmul.
    h = jnp.einsum("ve,tec->tvc", emb, g_pad).reshape(L * V, Cp)

    dec_w = jnp.asarray(params["dec_w"], jnp.float32)                # (n_out, Ct)
    dec_b = jnp.asarray(params["dec_b"], jnp.float32)
    wdec = jnp.zeros((Cp, Op), jnp.float32).at[:Ct, :n_out].set(dec_w.T)
    bdec = jnp.zeros((1, Op), jnp.float32).at[0, :n_out].set(dec_b)

    vpat = jnp.tile(jnp.arange(V, dtype=jnp.int32), L).reshape(1, L * V)
    alpha = jnp.full((1, 1), params["prelu_alpha"], jnp.float32)

    return dict(
        h=h.astype(matmul_dtype), wdec=wdec.astype(matmul_dtype),
        bconv=bconv, bdec=bdec, vpat=vpat, alpha=alpha,
        V=V, L=L, Cp=Cp, Op=Op, n_out=n_out,
    )


# ---------------------------------------------------------------------------
# Forward builder (single fused pallas_call)
# ---------------------------------------------------------------------------
def make_textcnn_forward(prep):
    V, L, Cp, Op, n_out = prep["V"], prep["L"], prep["Cp"], prep["Op"], prep["n_out"]
    h, wdec = prep["h"], prep["wdec"]
    bconv, bdec, vpat, alpha = prep["bconv"], prep["bdec"], prep["vpat"], prep["alpha"]
    LV = L * V

    @jax.jit
    def forward(premises, hypotheses):
        # Only tiny int32 ops stay on the XLA side (no fp gathers/concats of embeddings).
        ids = jnp.concatenate([premises, hypotheses], axis=1).astype(jnp.int32)   # (B, L)
        assert ids.shape[1] == L, "premise_len + hypothesis_len must match prepared L"
        B = ids.shape[0]
        ids_rep = jnp.repeat(ids, V, axis=1)                                      # (B, L*V)

        bt = _pick_batch_tile(B)
        grid = (B // bt,)
        # NOTE: at production shapes (large B / E / L), re-derive bt so that the
        # double-buffered (bt, L*V) input + (bt, Op) output fit v7x's 64 MiB VMEM.

        out = pl.pallas_call(
            textcnn_fused_kernel,
            out_shape=jax.ShapeDtypeStruct((B, Op), jnp.float32),
            grid=grid,
            in_specs=[
                pl.BlockSpec((bt, LV), lambda i: (i, 0)),            # ids_rep (batch-tiled)
                pl.BlockSpec((1, LV), lambda i: (0, 0)),             # vocab pattern
                pl.BlockSpec((LV, Cp), lambda i: (0, 0)),            # folded conv/pool weight
                pl.BlockSpec((1, Cp), lambda i: (0, 0)),             # conv bias
                pl.BlockSpec((Cp, Op), lambda i: (0, 0)),            # decoder weight
                pl.BlockSpec((1, Op), lambda i: (0, 0)),             # decoder bias
                pl.BlockSpec(memory_space=pltpu.MemorySpace.SMEM),   # PReLU alpha scalar
            ],
            out_specs=pl.BlockSpec((bt, Op), lambda i: (i, 0)),
            compiler_params=pltpu.CompilerParams(
                dimension_semantics=("parallel",)),                  # v7x: 2 TCs over batch
        )(ids_rep, vpat, h, bconv, wdec, bdec, alpha)

        return out[:, :n_out]                                        # slice padded logits

    return forward


# ---------------------------------------------------------------------------
# Pure-JAX reference (direct port of the PyTorch forward) for the sanity check
# ---------------------------------------------------------------------------
def ref_forward(params, premises, hypotheses):
    emb = params["embedding"]
    x = jnp.concatenate([emb[premises], emb[hypotheses]], axis=1)    # (B, L, E)
    a = params["prelu_alpha"]
    encs = []
    for (w, b) in params["convs"]:
        C, E, K = w.shape
        Lout = x.shape[1] - K + 1
        out = jnp.zeros((x.shape[0], Lout, C), jnp.float32)
        for dk in range(K):
            out = out + jnp.einsum("ble,ce->blc", x[:, dk:dk + Lout, :], w[:, :, dk])
        out = out + b
        pooled = out.mean(axis=1)
        encs.append(jnp.where(pooled > 0, pooled, a * pooled))
    enc = jnp.concatenate(encs, axis=1)
    return enc @ params["dec_w"].T + params["dec_b"]


if __name__ == "__main__":
    key = jax.random.PRNGKey(0)
    keys = jax.random.split(key, 16)

    vocab_size, embed_size = 50, 32
    kernel_sizes = (3, 4, 5)
    num_channels = (16, 16, 16)
    B, Lp, Lh = 2, 8, 8

    params = {}
    params["embedding"] = 0.1 * jax.random.normal(keys[0], (vocab_size, embed_size), jnp.float32)
    convs = []
    for i, (c, k) in enumerate(zip(num_channels, kernel_sizes)):
        w = 0.1 * jax.random.normal(keys[1 + 2 * i], (c, embed_size, k), jnp.float32)  # (C, E, K)
        bc = 0.1 * jax.random.normal(keys[2 + 2 * i], (c,), jnp.float32)
        convs.append((w, bc))
    params["convs"] = convs
    params["prelu_alpha"] = jnp.float32(0.25)                         # nn.PReLU() default
    params["dec_w"] = 0.1 * jax.random.normal(keys[10], (3, sum(num_channels)), jnp.float32)
    params["dec_b"] = 0.1 * jax.random.normal(keys[11], (3,), jnp.float32)

    premises = jax.random.randint(keys[12], (B, Lp), 0, vocab_size, jnp.int32)
    hypotheses = jax.random.randint(keys[13], (B, Lh), 0, vocab_size, jnp.int32)

    ref = ref_forward(params, premises, hypotheses)

    # f32 MXU inputs: tight check against the pure-JAX reference.
    prep_f32 = prepare_textcnn_params(params, Lp + Lh, matmul_dtype=jnp.float32)
    fwd_f32 = make_textcnn_forward(prep_f32)
    out_f32 = jax.block_until_ready(fwd_f32(premises, hypotheses))
    assert out_f32.shape == (B, 3)
    assert jnp.allclose(out_f32, ref, rtol=1e-4, atol=1e-4), "f32 Pallas output mismatch"

    # bf16 MXU inputs (recommended on v6e/v7x), f32 accumulation: looser tolerance.
    prep_bf16 = prepare_textcnn_params(params, Lp + Lh, matmul_dtype=jnp.bfloat16)
    fwd_bf16 = make_textcnn_forward(prep_bf16)
    out_bf16 = jax.block_until_ready(fwd_bf16(premises, hypotheses))
    assert out_bf16.shape == (B, 3)
    assert jnp.allclose(out_bf16, ref, rtol=2e-2, atol=2e-2), "bf16 Pallas output mismatch"

    print("KERNEL_OK")
</pallas_src>

<mosaic_0001>
module attributes {stable_mosaic.version = 11 : i64} {
  func.func @textcnn_fused_kernel(%arg0: i32, %arg1: memref<2x800xi32, #tpu.memory_space<vmem>>, %arg2: memref<1x800xi32, #tpu.memory_space<vmem>>, %arg3: memref<800x128xf32, #tpu.memory_space<vmem>>, %arg4: memref<1x128xf32, #tpu.memory_space<vmem>>, %arg5: memref<128x128xf32, #tpu.memory_space<vmem>>, %arg6: memref<1x128xf32, #tpu.memory_space<vmem>>, %arg7: memref<1x1xf32, #tpu.memory_space<smem>>, %arg8: memref<2x128xf32, #tpu.memory_space<vmem>>) attributes {dimension_semantics = [#tpu.dimension_semantics<parallel>], iteration_bounds = array<i64: 1>, scalar_prefetch = 0 : i64, scratch_operands = 0 : i64, tpu.core_type = #tpu.core_type<tc>, window_params = [{transform_indices = @transform_0, window_bounds = array<i64: 2, 800>}, {pipeline_mode = #tpu.pipeline_mode<synchronous>, transform_indices = @transform_1, window_bounds = array<i64: 1, 800>}, {pipeline_mode = #tpu.pipeline_mode<synchronous>, transform_indices = @transform_2, window_bounds = array<i64: 800, 128>}, {pipeline_mode = #tpu.pipeline_mode<synchronous>, transform_indices = @transform_3, window_bounds = array<i64: 1, 128>}, {pipeline_mode = #tpu.pipeline_mode<synchronous>, transform_indices = @transform_4, window_bounds = array<i64: 128, 128>}, {pipeline_mode = #tpu.pipeline_mode<synchronous>, transform_indices = @transform_5, window_bounds = array<i64: 1, 128>}, {transform_indices = @transform_6, window_bounds = array<i64: 1, 1>}, {transform_indices = @transform_7, window_bounds = array<i64: 2, 128>}]} {
    %c0 = arith.constant 0 : index
    %c0_0 = arith.constant 0 : index
    %0 = vector.load %arg1[%c0, %c0_0] : memref<2x800xi32, #tpu.memory_space<vmem>>, vector<2x800xi32>
    %c0_1 = arith.constant 0 : index
    %c0_2 = arith.constant 0 : index
    %1 = vector.load %arg2[%c0_1, %c0_2] : memref<1x800xi32, #tpu.memory_space<vmem>>, vector<1x800xi32>
    %2 = vector.broadcast %1 : vector<1x800xi32> to vector<2x800xi32>
    %3 = arith.cmpi eq, %0, %2 : vector<2x800xi32>
    %cst = arith.constant 1.000000e+00 : f32
    %cst_3 = arith.constant 0.000000e+00 : f32
    %4 = vector.broadcast %cst : f32 to vector<2x800xf32>
    %5 = vector.broadcast %cst_3 : f32 to vector<2x800xf32>
    %6 = arith.select %3, %4, %5 : vector<2x800xi1>, vector<2x800xf32>
    %c0_4 = arith.constant 0 : index
    %c0_5 = arith.constant 0 : index
    %7 = vector.load %arg3[%c0_4, %c0_5] : memref<800x128xf32, #tpu.memory_space<vmem>>, vector<800x128xf32>
    %cst_6 = arith.constant dense<0.000000e+00> : vector<2x128xf32>
    %8 = tpu.matmul %6, %7, %cst_6 {dimension_numbers = #tpu.dot_dimension_numbers<[1], [0], [0], [1], [0, 0, 1, 1], [], []>} : vector<2x800xf32>, vector<800x128xf32>, vector<2x128xf32> -> vector<2x128xf32>
    %c0_7 = arith.constant 0 : index
    %c0_8 = arith.constant 0 : index
    %9 = vector.load %arg4[%c0_7, %c0_8] : memref<1x128xf32, #tpu.memory_space<vmem>>, vector<1x128xf32>
    %10 = vector.broadcast %9 : vector<1x128xf32> to vector<2x128xf32>
    %11 = arith.addf %8, %10 : vector<2x128xf32>
    %c0_9 = arith.constant 0 : index
    %c0_10 = arith.constant 0 : index
    %12 = memref.load %arg7[%c0_9, %c0_10] : memref<1x1xf32, #tpu.memory_space<smem>>
    %cst_11 = arith.constant 0.000000e+00 : f32
    %13 = vector.broadcast %cst_11 : f32 to vector<2x128xf32>
    %14 = arith.cmpf ogt, %11, %13 : vector<2x128xf32>
    %15 = vector.broadcast %12 : f32 to vector<2x128xf32>
    %16 = arith.mulf %15, %11 : vector<2x128xf32>
    %17 = arith.select %14, %11, %16 : vector<2x128xi1>, vector<2x128xf32>
    %c0_12 = arith.constant 0 : index
    %c0_13 = arith.constant 0 : index
    %18 = vector.load %arg5[%c0_12, %c0_13] : memref<128x128xf32, #tpu.memory_space<vmem>>, vector<128x128xf32>
    %cst_14 = arith.constant dense<0.000000e+00> : vector<2x128xf32>
    %19 = tpu.matmul %17, %18, %cst_14 {dimension_numbers = #tpu.dot_dimension_numbers<[1], [0], [0], [1], [0, 0, 1, 1], [], []>} : vector<2x128xf32>, vector<128x128xf32>, vector<2x128xf32> -> vector<2x128xf32>
    %c0_15 = arith.constant 0 : index
    %c0_16 = arith.constant 0 : index
    %20 = vector.load %arg6[%c0_15, %c0_16] : memref<1x128xf32, #tpu.memory_space<vmem>>, vector<1x128xf32>
    %21 = vector.broadcast %20 : vector<1x128xf32> to vector<2x128xf32>
    %22 = arith.addf %19, %21 : vector<2x128xf32>
    %c0_17 = arith.constant 0 : index
    %c0_18 = arith.constant 0 : index
    %23 = vector.load %arg8[%c0_17, %c0_18] : memref<2x128xf32, #tpu.memory_space<vmem>>, vector<2x128xf32>
    tpu.vector_store %arg8[%c0_17, %c0_18], %22 {strides = array<i32>} : memref<2x128xf32, #tpu.memory_space<vmem>>, vector<2x128xf32>,
    return
  }
  func.func @transform_0(%arg0: i32) -> (i32, i32) {
    %c0_i32 = arith.constant 0 : i32
    %c0_i32_0 = arith.constant 0 : i32
    return %arg0, %c0_i32 : i32, i32
  }
  func.func @transform_1(%arg0: i32) -> (i32, i32) {
    %c0_i32 = arith.constant 0 : i32
    %c0_i32_0 = arith.constant 0 : i32
    %c0_i32_1 = arith.constant 0 : i32
    return %c0_i32, %c0_i32_0 : i32, i32
  }
  func.func @transform_2(%arg0: i32) -> (i32, i32) {
    %c0_i32 = arith.constant 0 : i32
    %c0_i32_0 = arith.constant 0 : i32
    %c0_i32_1 = arith.constant 0 : i32
    return %c0_i32, %c0_i32_0 : i32, i32
  }
  func.func @transform_3(%arg0: i32) -> (i32, i32) {
    %c0_i32 = arith.constant 0 : i32
    %c0_i32_0 = arith.constant 0 : i32
    %c0_i32_1 = arith.constant 0 : i32
    return %c0_i32, %c0_i32_0 : i32, i32
  }
  func.func @transform_4(%arg0: i32) -> (i32, i32) {
    %c0_i32 = arith.constant 0 : i32
    %c0_i32_0 = arith.constant 0 : i32
    %c0_i32_1 = arith.constant 0 : i32
    return %c0_i32, %c0_i32_0 : i32, i32
  }
  func.func @transform_5(%arg0: i32) -> (i32, i32) {
    %c0_i32 = arith.constant 0 : i32
    %c0_i32_0 = arith.constant 0 : i32
    %c0_i32_1 = arith.constant 0 : i32
    return %c0_i32, %c0_i32_0 : i32, i32
  }
  func.func @transform_6(%arg0: i32) -> (i32, i32) {
    %c0_i32 = arith.constant 0 : i32
    %c0_i32_0 = arith.constant 0 : i32
    %c0_i32_1 = arith.constant 0 : i32
    return %c0_i32, %c0_i32_0 : i32, i32
  }
  func.func @transform_7(%arg0: i32) -> (i32, i32) {
    %c0_i32 = arith.constant 0 : i32
    %c0_i32_0 = arith.constant 0 : i32
    return %arg0, %c0_i32 : i32, i32
  }
}

</mosaic_0001>

<llo_original>
// kernel: forward.1
$region0: #{forward.1}
  #allocation0 [shape = 'u32[]', space=smem, size = 0x4, offset = 0x4, fixed_abs, tag = 'smem constant byte address 0x4 - core index']
  #allocation1 [shape = 'u32[144,128]{1,0:T(1,128)}', space=vmem, size = 0x12000, scoped, tag = 'internal scratch']
  #allocation2 [shape = 'f32[1,1]{1,0:T(1,128)S(6)}', space=smem, size = 0x200, scoped, tag = 'scoped memory for forward.1']
  %s0 = inlined_call_operand.vmem [shape: s32[2,800], index: 0, kind: input, shape index: {}]
  %s1 = inlined_call_operand.vmem [shape: s32[1,800], index: 1, kind: input, shape index: {}]
  %s2 = inlined_call_operand.hbm [shape: f32[800,128], index: 2, kind: input, shape index: {}]
  %s3 = inlined_call_operand.vmem [shape: f32[1,128], index: 3, kind: input, shape index: {}]
  %s4 = inlined_call_operand.hbm [shape: f32[128,128], index: 4, kind: input, shape index: {}]
  %s5 = inlined_call_operand.vmem [shape: f32[1,128], index: 5, kind: input, shape index: {}]
  %s6 = inlined_call_operand.<no memory space> [shape: f32[1,1], index: 6, kind: input, shape index: {}]
  %s7 = inlined_call_operand.hbm [shape: f32[2,128], index: 7, kind: output, shape index: {}]
  %s8 = sld [smem:[#allocation0]]
  $region46: #{forward.1} parent=0
    _
  %s10 = ssub.s32 1, %s8
  %s11 = scalar_select 0, %s10, %s8
  %12 = sst [smem:[#allocation2]] %s6
  $region1: #{forward.1} parent=0
    #allocation3 [shape = 'u8[409600]{0}', space=vmem, size = 0x64000, scoped, tag = 'input window, operand 2, single buffered']
    #allocation4 [shape = 's32[1]{0}', space=sflag, size = 0x4, scoped, tag = 'scoped memory for forward.1']
    #allocation5 [shape = 's32[1]{0}', space=sflag, size = 0x4, scoped, tag = 'scoped memory for forward.1']
    #allocation6 [shape = 'u8[65536]{0}', space=vmem, size = 0x10000, scoped, tag = 'input window, operand 4, single buffered']
    #allocation7 [shape = 's32[1]{0}', space=sflag, size = 0x4, scoped, tag = 'scoped memory for forward.1']
    #allocation8 [shape = 'u8[1024]{0}', space=vmem, size = 0x400, scoped, tag = 'output window, operand 0, single buffered']
    %13 = vsyncpa [#allocation4], 0
    %14 = vsyncpa [#allocation7], 0
    %15 = vsyncpa [#allocation5], 0
    // Predicated region
    $region2: #{forward.1} parent=1 // pred_check
      _
    $region3: #{forward.1} parent=1 // pred_check_branch
      %17 = sbr.rel (0) target = $region5
    $region4: #{forward.1} parent=1 // pred_region
      _
    $region5: #{forward.1} parent=1 // pred_fallthru
      _
    // Predicated region
    $region6: #{forward.1} parent=1 // pred_check
      _
    $region7: #{forward.1} parent=1 // pred_check_branch
      %19 = sbr.rel (0) target = $region9
    $region8: #{forward.1} parent=1 // pred_region
      _
    $region9: #{forward.1} parent=1 // pred_fallthru
      _
    // Predicated region
    $region10: #{forward.1} parent=1 // pred_check
      _
    $region11: #{forward.1} parent=1 // pred_check_branch
      %21 = sbr.rel (0) target = $region13
    $region12: #{forward.1} parent=1 // pred_region
      %s23 = ssub.s32 12800, 12800
      %24 = vsyncadd [#allocation4], %s23
      %s25 = sshll.u32 [#allocation3], 4
      %s26 = int_to_ptr.vmem [resolvable:$true] %s25
      %31 = dma.hbm_to_vmem [thread:$0]  %s2, 12800, %s26, [#allocation4], 128, 128, 8
    $region13: #{forward.1} parent=1 // pred_fallthru
      _
    // Predicated region
    $region14: #{forward.1} parent=1 // pred_check
      _
    $region15: #{forward.1} parent=1 // pred_check_branch
      %33 = sbr.rel (0) target = $region17
    $region16: #{forward.1} parent=1 // pred_region
      _
    $region17: #{forward.1} parent=1 // pred_fallthru
      _
    // Predicated region
    $region18: #{forward.1} parent=1 // pred_check
      _
    $region19: #{forward.1} parent=1 // pred_check_branch
      %35 = sbr.rel (0) target = $region21
    $region20: #{forward.1} parent=1 // pred_region
      %s37 = ssub.s32 2048, 2048
      %38 = vsyncadd [#allocation7], %s37
      %s39 = sshll.u32 [#allocation6], 4
      %s40 = int_to_ptr.vmem [resolvable:$true] %s39
      %45 = dma.hbm_to_vmem [thread:$0]  %s4, 2048, %s40, [#allocation7], 128, 128, 8
    $region21: #{forward.1} parent=1 // pred_fallthru
      _
    // Predicated region
    $region22: #{forward.1} parent=1 // pred_check
      _
    $region23: #{forward.1} parent=1 // pred_check_branch
      %47 = sbr.rel (0) target = $region25
    $region24: #{forward.1} parent=1 // pred_region
      _
    $region25: #{forward.1} parent=1 // pred_fallthru
      _
    // Predicated region
    $region26: #{forward.1} parent=1 // pred_check
      _
    $region27: #{forward.1} parent=1 // pred_check_branch
      %49 = sbr.rel (0) target = $region29
    $region28: #{forward.1} parent=1 // pred_region
      _
    $region29: #{forward.1} parent=1 // pred_fallthru
      _
    // Predicated region
    $region30: #{forward.1} parent=1 // pred_check
      _
    $region31: #{forward.1} parent=1 // pred_check_branch
      %51 = sbr.rel (0) target = $region33
    $region32: #{forward.1} parent=1 // pred_region
      %52 = dma.done [#allocation4], 12800
    $region33: #{forward.1} parent=1 // pred_fallthru
      _
    // Predicated region
    $region34: #{forward.1} parent=1 // pred_check
      _
    $region35: #{forward.1} parent=1 // pred_check_branch
      %54 = sbr.rel (0) target = $region37
    $region36: #{forward.1} parent=1 // pred_region
      %55 = dma.done [#allocation7], 2048
    $region37: #{forward.1} parent=1 // pred_fallthru
      _
    %v56 = vld [vmem:[%s0] sm:$0xff]
    %v57 = vld [vmem:[%s0 + $0x8] sm:$0x3f]
    %v58 = vld [vmem:[%s1] sm:$0x7f]
    %v59 = vlaneseq
    %v60 = vshrl.u32 %v59, 7
    %v61 = vsub.s32 0, %v60
    %v62 = vrot.slane %v58, %v61
    %v63 = vlaneseq
    %v64 = vshrl.u32 %v63, 7
    %v65 = vsub.s32 1, %v64
    %v66 = vrot.slane %v58, %v65
    %v67 = vlaneseq
    %v68 = vshrl.u32 %v67, 7
    %v69 = vsub.s32 2, %v68
    %v70 = vrot.slane %v58, %v69
    %v71 = vlaneseq
    %v72 = vshrl.u32 %v71, 7
    %v73 = vsub.s32 3, %v72
    %v74 = vrot.slane %v58, %v73
    %v75 = vlaneseq
    %v76 = vshrl.u32 %v75, 7
    %v77 = vsub.s32 4, %v76
    %v78 = vrot.slane %v58, %v77
    %v79 = vlaneseq
    %v80 = vshrl.u32 %v79, 7
    %v81 = vsub.s32 5, %v80
    %v82 = vrot.slane %v58, %v81
    %v83 = vlaneseq
    %v84 = vshrl.u32 %v83, 7
    %v85 = vsub.s32 6, %v84
    %v86 = vrot.slane %v58, %v85
    %v87 = vcombine.low %v62, %v66
    %v88 = vcombine.low %v70, %v74
    %v90 = vunpack.c.l.s4 1983009808
    %v91 = vunpack.c.0.s8 %v90
    %v92 = vlaneseq
    %v93 = vshrl.u32 %v92, 7
    %v94 = vsub.s32 %v91, %v93
    %v95 = vrot.slane %v87, %v94
    %v97 = vunpack.c.l.s4 1983009808
    %v98 = vunpack.c.0.s8 %v97
    %v99 = vlaneseq
    %v100 = vshrl.u32 %v99, 7
    %v101 = vsub.s32 %v98, %v100
    %v102 = vrot.slane %v88, %v101
    %v103 = vcombine.low %v95, %v102
    %v104 = vcombine.low %v78, %v82
    %v106 = vunpack.c.l.s4 1983009808
    %v107 = vunpack.c.0.s8 %v106
    %v108 = vlaneseq
    %v109 = vshrl.u32 %v108, 7
    %v110 = vsub.s32 %v107, %v109
    %v111 = vrot.slane %v104, %v110
    %v113 = vunpack.c.l.s4 1983009808
    %v114 = vunpack.c.0.s8 %v113
    %v115 = vlaneseq
    %v116 = vshrl.u32 %v115, 7
    %v117 = vsub.s32 %v114, %v116
    %v118 = vrot.slane %v86, %v117
    %v119 = vcombine.low %v111, %v118
    %vm120 = vcmp.eq.s32.totalorder %v56, %v103
    %vm121 = vcmp.eq.s32.totalorder %v57, %v119
    %v122 = vsel %vm120, 1.0, 0.0
    %v123 = vsel %vm121, 1.0, 0.0
    %v124 = vld [vmem:[#allocation3] sm:$0xff]
    %v125 = vld [vmem:[#allocation3 + $0x8] sm:$0xff]
    %v126 = vld [vmem:[#allocation3 + $0x10] sm:$0xff]
    %v127 = vld [vmem:[#allocation3 + $0x18] sm:$0xff]
    %v128 = vld [vmem:[#allocation3 + $0x20] sm:$0xff]
    %v129 = vld [vmem:[#allocation3 + $0x28] sm:$0xff]
    %v130 = vld [vmem:[#allocation3 + $0x30] sm:$0xff]
    %v131 = vld [vmem:[#allocation3 + $0x38] sm:$0xff]
    %v132 = vld [vmem:[#allocation3 + $0x40] sm:$0xff]
    %v133 = vld [vmem:[#allocation3 + $0x48] sm:$0xff]
    %v134 = vld [vmem:[#allocation3 + $0x50] sm:$0xff]
    %v135 = vld [vmem:[#allocation3 + $0x58] sm:$0xff]
    %v136 = vld [vmem:[#allocation3 + $0x60] sm:$0xff]
    %v137 = vld [vmem:[#allocation3 + $0x68] sm:$0xff]
    %v138 = vld [vmem:[#allocation3 + $0x70] sm:$0xff]
    %v139 = vld [vmem:[#allocation3 + $0x78] sm:$0xff]
    %v140 = vld [vmem:[#allocation3 + $0x80] sm:$0xff]
    %v141 = vld [vmem:[#allocation3 + $0x88] sm:$0xff]
    %v142 = vld [vmem:[#allocation3 + $0x90] sm:$0xff]
    %v143 = vld [vmem:[#allocation3 + $0x98] sm:$0xff]
    %v144 = vld [vmem:[#allocation3 + $0xa0] sm:$0xff]
    %v145 = vld [vmem:[#allocation3 + $0xa8] sm:$0xff]
    %v146 = vld [vmem:[#allocation3 + $0xb0] sm:$0xff]
    %v147 = vld [vmem:[#allocation3 + $0xb8] sm:$0xff]
    %v148 = vld [vmem:[#allocation3 + $0xc0] sm:$0xff]
    %v149 = vld [vmem:[#allocation3 + $0xc8] sm:$0xff]
    %v150 = vld [vmem:[#allocation3 + $0xd0] sm:$0xff]
    %v151 = vld [vmem:[#allocation3 + $0xd8] sm:$0xff]
    %v152 = vld [vmem:[#allocation3 + $0xe0] sm:$0xff]
    %v153 = vld [vmem:[#allocation3 + $0xe8] sm:$0xff]
    %v154 = vld [vmem:[#allocation3 + $0xf0] sm:$0xff]
    %v155 = vld [vmem:[#allocation3 + $0xf8] sm:$0xff]
    %v156 = vld [vmem:[#allocation3 + $0x100] sm:$0xff]
    %v157 = vld [vmem:[#allocation3 + $0x108] sm:$0xff]
    %v158 = vld [vmem:[#allocation3 + $0x110] sm:$0xff]
    %v159 = vld [vmem:[#allocation3 + $0x118] sm:$0xff]
    %v160 = vld [vmem:[#allocation3 + $0x120] sm:$0xff]
    %v161 = vld [vmem:[#allocation3 + $0x128] sm:$0xff]
    %v162 = vld [vmem:[#allocation3 + $0x130] sm:$0xff]
    %v163 = vld [vmem:[#allocation3 + $0x138] sm:$0xff]
    %v164 = vld [vmem:[#allocation3 + $0x140] sm:$0xff]
    %v165 = vld [vmem:[#allocation3 + $0x148] sm:$0xff]
    %v166 = vld [vmem:[#allocation3 + $0x150] sm:$0xff]
    %v167 = vld [vmem:[#allocation3 + $0x158] sm:$0xff]
    %v168 = vld [vmem:[#allocation3 + $0x160] sm:$0xff]
    %v169 = vld [vmem:[#allocation3 + $0x168] sm:$0xff]
    %v170 = vld [vmem:[#allocation3 + $0x170] sm:$0xff]
    %v171 = vld [vmem:[#allocation3 + $0x178] sm:$0xff]
    %v172 = vld [vmem:[#allocation3 + $0x180] sm:$0xff]
    %v173 = vld [vmem:[#allocation3 + $0x188] sm:$0xff]
    %v174 = vld [vmem:[#allocation3 + $0x190] sm:$0xff]
    %v175 = vld [vmem:[#allocation3 + $0x198] sm:$0xff]
    %v176 = vld [vmem:[#allocation3 + $0x1a0] sm:$0xff]
    %v177 = vld [vmem:[#allocation3 + $0x1a8] sm:$0xff]
    %v178 = vld [vmem:[#allocation3 + $0x1b0] sm:$0xff]
    %v179 = vld [vmem:[#allocation3 + $0x1b8] sm:$0xff]
    %v180 = vld [vmem:[#allocation3 + $0x1c0] sm:$0xff]
    %v181 = vld [vmem:[#allocation3 + $0x1c8] sm:$0xff]
    %v182 = vld [vmem:[#allocation3 + $0x1d0] sm:$0xff]
    %v183 = vld [vmem:[#allocation3 + $0x1d8] sm:$0xff]
    %v184 = vld [vmem:[#allocation3 + $0x1e0] sm:$0xff]
    %v185 = vld [vmem:[#allocation3 + $0x1e8] sm:$0xff]
    %v186 = vld [vmem:[#allocation3 + $0x1f0] sm:$0xff]
    %v187 = vld [vmem:[#allocation3 + $0x1f8] sm:$0xff]
    %v188 = vld [vmem:[#allocation3 + $0x200] sm:$0xff]
    %v189 = vld [vmem:[#allocation3 + $0x208] sm:$0xff]
    %v190 = vld [vmem:[#allocation3 + $0x210] sm:$0xff]
    %v191 = vld [vmem:[#allocation3 + $0x218] sm:$0xff]
    %v192 = vld [vmem:[#allocation3 + $0x220] sm:$0xff]
    %v193 = vld [vmem:[#allocation3 + $0x228] sm:$0xff]
    %v194 = vld [vmem:[#allocation3 + $0x230] sm:$0xff]
    %v195 = vld [vmem:[#allocation3 + $0x238] sm:$0xff]
    %v196 = vld [vmem:[#allocation3 + $0x240] sm:$0xff]
    %v197 = vld [vmem:[#allocation3 + $0x248] sm:$0xff]
    %v198 = vld [vmem:[#allocation3 + $0x250] sm:$0xff]
    %v199 = vld [vmem:[#allocation3 + $0x258] sm:$0xff]
    %v200 = vld [vmem:[#allocation3 + $0x260] sm:$0xff]
    %v201 = vld [vmem:[#allocation3 + $0x268] sm:$0xff]
    %v202 = vld [vmem:[#allocation3 + $0x270] sm:$0xff]
    %v203 = vld [vmem:[#allocation3 + $0x278] sm:$0xff]
    %v204 = vld [vmem:[#allocation3 + $0x280] sm:$0xff]
    %v205 = vld [vmem:[#allocation3 + $0x288] sm:$0xff]
    %v206 = vld [vmem:[#allocation3 + $0x290] sm:$0xff]
    %v207 = vld [vmem:[#allocation3 + $0x298] sm:$0xff]
    %v208 = vld [vmem:[#allocation3 + $0x2a0] sm:$0xff]
    %v209 = vld [vmem:[#allocation3 + $0x2a8] sm:$0xff]
    %v210 = vld [vmem:[#allocation3 + $0x2b0] sm:$0xff]
    %v211 = vld [vmem:[#allocation3 + $0x2b8] sm:$0xff]
    %v212 = vld [vmem:[#allocation3 + $0x2c0] sm:$0xff]
    %v213 = vld [vmem:[#allocation3 + $0x2c8] sm:$0xff]
    %v214 = vld [vmem:[#allocation3 + $0x2d0] sm:$0xff]
    %v215 = vld [vmem:[#allocation3 + $0x2d8] sm:$0xff]
    %v216 = vld [vmem:[#allocation3 + $0x2e0] sm:$0xff]
    %v217 = vld [vmem:[#allocation3 + $0x2e8] sm:$0xff]
    %v218 = vld [vmem:[#allocation3 + $0x2f0] sm:$0xff]
    %v219 = vld [vmem:[#allocation3 + $0x2f8] sm:$0xff]
    %v220 = vld [vmem:[#allocation3 + $0x300] sm:$0xff]
    %v221 = vld [vmem:[#allocation3 + $0x308] sm:$0xff]
    %v222 = vld [vmem:[#allocation3 + $0x310] sm:$0xff]
    %v223 = vld [vmem:[#allocation3 + $0x318] sm:$0xff]
    %v224 = vld [vmem:[%s3] sm:$0x1]
    %v226 = vlaneseq
    %v227 = vshrl.u32 %v226, 7
    %v228 = vsub.s32 0, %v227
    %v229 = vrot.slane %v224, %v228
    %v233 = vcombine.high %v122, %v122
    %v235 = vunpack.c.l.s4 1983009808
    %v236 = vunpack.c.0.s8 %v235
    %v237 = vlaneseq
    %v238 = vshrl.u32 %v237, 7
    %v239 = vsub.s32 %v236, %v238
    %v240 = vrot.slane %v122, %v239
    %v242 = vunpack.c.l.s4 1983009808
    %v243 = vunpack.c.0.s8 %v242
    %v244 = vlaneseq
    %v245 = vshrl.u32 %v244, 7
    %v246 = vsub.s32 %v243, %v245
    %v247 = vrot.slane %v233, %v246
    %v248 = vcombine.high %v240, %v240
    %v249 = vcombine.high %v247, %v247
    %v250 = vcombine.high %v123, %v123
    %v252 = vunpack.c.l.s4 1983009808
    %v253 = vunpack.c.0.s8 %v252
    %v254 = vlaneseq
    %v255 = vshrl.u32 %v254, 7
    %v256 = vsub.s32 %v253, %v255
    %v257 = vrot.slane %v123, %v256
    %v259 = vunpack.c.l.s4 1983009808
    %v260 = vunpack.c.0.s8 %v259
    %v261 = vlaneseq
    %v262 = vshrl.u32 %v261, 7
    %v263 = vsub.s32 %v260, %v262
    %v264 = vrot.slane %v250, %v263
    %v265 = vcombine.high %v257, %v257
    %vm272 = vcmask 261120
    %v273 = vsel %vm272, %v264, 0
    %275 = vmatprep.subr.mxu0 0.0
    %276 = vmatpush1.msra.mxu0 %v124
    %277 = vmatprep.subr.mxu0 0.0
    %278 = vmatpush1.msra.mxu0 %v125
    %279 = vmatprep.subr.mxu0 0.0
    %280 = vmatpush1.msra.mxu0 %v126
    %281 = vmatprep.subr.mxu0 0.0
    %282 = vmatpush1.msra.mxu0 %v127
    %283 = vmatprep.subr.mxu0 0.0
    %284 = vmatpush1.msra.mxu0 %v128
    %285 = vmatprep.subr.mxu0 0.0
    %286 = vmatpush1.msra.mxu0 %v129
    %287 = vmatprep.subr.mxu0 0.0
    %288 = vmatpush1.msra.mxu0 %v130
    %289 = vmatprep.subr.mxu0 0.0
    %290 = vmatpush1.msra.mxu0 %v131
    %291 = vmatprep.subr.mxu0 0.0
    %292 = vmatpush1.msra.mxu0 %v132
    %293 = vmatprep.subr.mxu0 0.0
    %294 = vmatpush1.msra.mxu0 %v133
    %295 = vmatprep.subr.mxu0 0.0
    %296 = vmatpush1.msra.mxu0 %v134
    %297 = vmatprep.subr.mxu0 0.0
    %298 = vmatpush1.msra.mxu0 %v135
    %299 = vmatprep.subr.mxu0 0.0
    %300 = vmatpush1.msra.mxu0 %v136
    %301 = vmatprep.subr.mxu0 0.0
    %302 = vmatpush1.msra.mxu0 %v137
    %303 = vmatprep.subr.mxu0 0.0
    %304 = vmatpush1.msra.mxu0 %v138
    %305 = vmatprep.subr.mxu0 0.0
    %306 = vmatpush1.msra.mxu0 %v139
    %307 = vmatprep.subr.mxu0 0.0
    %308 = vmatpush1.msra.mxu0 %v140
    %309 = vmatprep.subr.mxu0 0.0
    %310 = vmatpush1.msra.mxu0 %v141
    %311 = vmatprep.subr.mxu0 0.0
    %312 = vmatpush1.msra.mxu0 %v142
    %313 = vmatprep.subr.mxu0 0.0
    %314 = vmatpush1.msra.mxu0 %v143
    %315 = vmatprep.subr.mxu0 0.0
    %316 = vmatpush1.msra.mxu0 %v144
    %317 = vmatprep.subr.mxu0 0.0
    %318 = vmatpush1.msra.mxu0 %v145
    %319 = vmatprep.subr.mxu0 0.0
    %320 = vmatpush1.msra.mxu0 %v146
    %321 = vmatprep.subr.mxu0 0.0
    %322 = vmatpush1.msra.mxu0 %v147
    %323 = vmatprep.subr.mxu0 0.0
    %324 = vmatpush1.msra.mxu0 %v148
    %325 = vmatprep.subr.mxu0 0.0
    %326 = vmatpush1.msra.mxu0 %v149
    %327 = vmatprep.subr.mxu0 0.0
    %328 = vmatpush1.msra.mxu0 %v150
    %329 = vmatprep.subr.mxu0 0.0
    %330 = vmatpush1.msra.mxu0 %v151
    %331 = vmatprep.subr.mxu0 0.0
    %332 = vmatpush1.msra.mxu0 %v152
    %333 = vmatprep.subr.mxu0 0.0
    %334 = vmatpush1.msra.mxu0 %v153
    %335 = vmatprep.subr.mxu0 0.0
    %336 = vmatpush1.msra.mxu0 %v154
    %337 = vmatprep.subr.mxu0 0.0
    %338 = vmatpush1.msra.mxu0 %v155
    %339 = vmatprep.mubr.f32.mxu0 %v248
    %340 = vmatmul.mubr.f32.gmra.mrb[0].mxu0 %v240
    %v341 = vpop.f32.mrb[0].mxu0
    %v342 = vadd.f32 %v229, %v341
    %v343 = vpop.f32.mrb[0].mxu0
    %344 = vdwg.mxu0
    %345 = vmatprep.subr.mxu0 0.0
    %346 = vmatpush1.msra.mxu0 %v156
    %347 = vmatprep.subr.mxu0 0.0
    %348 = vmatpush1.msra.mxu0 %v157
    %349 = vmatprep.subr.mxu0 0.0
    %350 = vmatpush1.msra.mxu0 %v158
    %351 = vmatprep.subr.mxu0 0.0
    %352 = vmatpush1.msra.mxu0 %v159
    %353 = vmatprep.subr.mxu0 0.0
    %354 = vmatpush1.msra.mxu0 %v160
    %355 = vmatprep.subr.mxu0 0.0
    %356 = vmatpush1.msra.mxu0 %v161
    %357 = vmatprep.subr.mxu0 0.0
    %358 = vmatpush1.msra.mxu0 %v162
    %359 = vmatprep.subr.mxu0 0.0
    %360 = vmatpush1.msra.mxu0 %v163
    %361 = vmatprep.subr.mxu0 0.0
    %362 = vmatpush1.msra.mxu0 %v164
    %363 = vmatprep.subr.mxu0 0.0
    %364 = vmatpush1.msra.mxu0 %v165
    %365 = vmatprep.subr.mxu0 0.0
    %366 = vmatpush1.msra.mxu0 %v166
    %367 = vmatprep.subr.mxu0 0.0
    %368 = vmatpush1.msra.mxu0 %v167
    %369 = vmatprep.subr.mxu0 0.0
    %370 = vmatpush1.msra.mxu0 %v168
    %371 = vmatprep.subr.mxu0 0.0
    %372 = vmatpush1.msra.mxu0 %v169
    %373 = vmatprep.subr.mxu0 0.0
    %374 = vmatpush1.msra.mxu0 %v170
    %375 = vmatprep.subr.mxu0 0.0
    %376 = vmatpush1.msra.mxu0 %v171
    %377 = vmatprep.subr.mxu0 0.0
    %378 = vmatpush1.msra.mxu0 %v172
    %379 = vmatprep.subr.mxu0 0.0
    %380 = vmatpush1.msra.mxu0 %v173
    %381 = vmatprep.subr.mxu0 0.0
    %382 = vmatpush1.msra.mxu0 %v174
    %383 = vmatprep.subr.mxu0 0.0
    %384 = vmatpush1.msra.mxu0 %v175
    %385 = vmatprep.subr.mxu0 0.0
    %386 = vmatpush1.msra.mxu0 %v176
    %387 = vmatprep.subr.mxu0 0.0
    %388 = vmatpush1.msra.mxu0 %v177
    %389 = vmatprep.subr.mxu0 0.0
    %390 = vmatpush1.msra.mxu0 %v178
    %391 = vmatprep.subr.mxu0 0.0
    %392 = vmatpush1.msra.mxu0 %v179
    %393 = vmatprep.subr.mxu0 0.0
    %394 = vmatpush1.msra.mxu0 %v180
    %395 = vmatprep.subr.mxu0 0.0
    %396 = vmatpush1.msra.mxu0 %v181
    %397 = vmatprep.subr.mxu0 0.0
    %398 = vmatpush1.msra.mxu0 %v182
    %399 = vmatprep.subr.mxu0 0.0
    %400 = vmatpush1.msra.mxu0 %v183
    %401 = vmatprep.subr.mxu0 0.0
    %402 = vmatpush1.msra.mxu0 %v184
    %403 = vmatprep.subr.mxu0 0.0
    %404 = vmatpush1.msra.mxu0 %v185
    %405 = vmatprep.subr.mxu0 0.0
    %406 = vmatpush1.msra.mxu0 %v186
    %407 = vmatprep.subr.mxu0 0.0
    %408 = vmatpush1.msra.mxu0 %v187
    %409 = vmatprep.mubr.f32.mxu0 %v249
    %410 = vmatmul.mubr.f32.gmra.mrb[0].mxu0 %v247
    %v411 = vpop.f32.mrb[0].mxu0
    %v412 = vadd.f32 %v342, %v411
    %v413 = vpop.f32.mrb[0].mxu0
    %414 = vdwg.mxu0
    %415 = vmatprep.subr.mxu0 0.0
    %416 = vmatpush1.msra.mxu0 %v188
    %417 = vmatprep.subr.mxu0 0.0
    %418 = vmatpush1.msra.mxu0 %v189
    %419 = vmatprep.subr.mxu0 0.0
    %420 = vmatpush1.msra.mxu0 %v190
    %421 = vmatprep.subr.mxu0 0.0
    %422 = vmatpush1.msra.mxu0 %v191
    %423 = vmatprep.subr.mxu0 0.0
    %424 = vmatpush1.msra.mxu0 %v192
    %425 = vmatprep.subr.mxu0 0.0
    %426 = vmatpush1.msra.mxu0 %v193
    %427 = vmatprep.subr.mxu0 0.0
    %428 = vmatpush1.msra.mxu0 %v194
    %429 = vmatprep.subr.mxu0 0.0
    %430 = vmatpush1.msra.mxu0 %v195
    %431 = vmatprep.subr.mxu0 0.0
    %432 = vmatpush1.msra.mxu0 %v196
    %433 = vmatprep.subr.mxu0 0.0
    %434 = vmatpush1.msra.mxu0 %v197
    %435 = vmatprep.subr.mxu0 0.0
    %436 = vmatpush1.msra.mxu0 %v198
    %437 = vmatprep.subr.mxu0 0.0
    %438 = vmatpush1.msra.mxu0 %v199
    %439 = vmatprep.subr.mxu0 0.0
    %440 = vmatpush1.msra.mxu0 %v200
    %441 = vmatprep.subr.mxu0 0.0
    %442 = vmatpush1.msra.mxu0 %v201
    %443 = vmatprep.subr.mxu0 0.0
    %444 = vmatpush1.msra.mxu0 %v202
    %445 = vmatprep.subr.mxu0 0.0
    %446 = vmatpush1.msra.mxu0 %v203
    %447 = vmatprep.subr.mxu0 0.0
    %448 = vmatpush1.msra.mxu0 %v204
    %449 = vmatprep.subr.mxu0 0.0
    %450 = vmatpush1.msra.mxu0 %v205
    %451 = vmatprep.subr.mxu0 0.0
    %452 = vmatpush1.msra.mxu0 %v206
    %453 = vmatprep.subr.mxu0 0.0
    %454 = vmatpush1.msra.mxu0 %v207
    %455 = vmatprep.subr.mxu0 0.0
    %456 = vmatpush1.msra.mxu0 %v208
    %457 = vmatprep.subr.mxu0 0.0
    %458 = vmatpush1.msra.mxu0 %v209
    %459 = vmatprep.subr.mxu0 0.0
    %460 = vmatpush1.msra.mxu0 %v210
    %461 = vmatprep.subr.mxu0 0.0
    %462 = vmatpush1.msra.mxu0 %v211
    %463 = vmatprep.subr.mxu0 0.0
    %464 = vmatpush1.msra.mxu0 %v212
    %465 = vmatprep.subr.mxu0 0.0
    %466 = vmatpush1.msra.mxu0 %v213
    %467 = vmatprep.subr.mxu0 0.0
    %468 = vmatpush1.msra.mxu0 %v214
    %469 = vmatprep.subr.mxu0 0.0
    %470 = vmatpush1.msra.mxu0 %v215
    %471 = vmatprep.subr.mxu0 0.0
    %472 = vmatpush1.msra.mxu0 %v216
    %473 = vmatprep.subr.mxu0 0.0
    %474 = vmatpush1.msra.mxu0 %v217
    %475 = vmatprep.subr.mxu0 0.0
    %476 = vmatpush1.msra.mxu0 %v218
    %477 = vmatprep.subr.mxu0 0.0
    %478 = vmatpush1.msra.mxu0 %v219
    %479 = vmatprep.mubr.f32.mxu0 %v265
    %480 = vmatmul.mubr.f32.gmra.mrb[0].mxu0 %v257
    %v481 = vpop.f32.mrb[0].mxu0
    %v482 = vadd.f32 %v412, %v481
    %v483 = vpop.f32.mrb[0].mxu0
    %484 = vdwg.mxu0
    %485 = vmatprep.subr.mxu0 0.0
    %486 = vmatpush1.msra.mxu0 %v220
    %487 = vmatprep.subr.mxu0 0.0
    %488 = vmatpush1.msra.mxu0 %v221
    %489 = vmatprep.subr.mxu0 0.0
    %490 = vmatpush1.msra.mxu0 %v222
    %491 = vmatprep.subr.mxu0 0.0
    %492 = vmatpush1.msra.mxu0 %v223
    %493 = vmatprep.subr.mxu0 0.0
    %494 = vmatpush1.msra.mxu0 0.0
    %495 = vmatprep.subr.mxu0 0.0
    %496 = vmatpush1.msra.mxu0 0.0
    %497 = vmatprep.subr.mxu0 0.0
    %498 = vmatpush1.msra.mxu0 0.0
    %499 = vmatprep.subr.mxu0 0.0
    %500 = vmatpush1.msra.mxu0 0.0
    %501 = vmatprep.subr.mxu0 0.0
    %502 = vmatpush1.msra.mxu0 0.0
    %503 = vmatprep.subr.mxu0 0.0
    %504 = vmatpush1.msra.mxu0 0.0
    %505 = vmatprep.subr.mxu0 0.0
    %506 = vmatpush1.msra.mxu0 0.0
    %507 = vmatprep.subr.mxu0 0.0
    %508 = vmatpush1.msra.mxu0 0.0
    %509 = vmatprep.subr.mxu0 0.0
    %510 = vmatpush1.msra.mxu0 0.0
    %511 = vmatprep.subr.mxu0 0.0
    %512 = vmatpush1.msra.mxu0 0.0
    %513 = vmatprep.subr.mxu0 0.0
    %514 = vmatpush1.msra.mxu0 0.0
    %515 = vmatprep.subr.mxu0 0.0
    %516 = vmatpush1.msra.mxu0 0.0
    %517 = vmatprep.subr.mxu0 0.0
    %518 = vmatpush1.msra.mxu0 0.0
    %519 = vmatprep.subr.mxu0 0.0
    %520 = vmatpush1.msra.mxu0 0.0
    %521 = vmatprep.subr.mxu0 0.0
    %522 = vmatpush1.msra.mxu0 0.0
    %523 = vmatprep.subr.mxu0 0.0
    %524 = vmatpush1.msra.mxu0 0.0
    %525 = vmatprep.subr.mxu0 0.0
    %526 = vmatpush1.msra.mxu0 0.0
    %527 = vmatprep.subr.mxu0 0.0
    %528 = vmatpush1.msra.mxu0 0.0
    %529 = vmatprep.subr.mxu0 0.0
    %530 = vmatpush1.msra.mxu0 0.0
    %531 = vmatprep.subr.mxu0 0.0
    %532 = vmatpush1.msra.mxu0 0.0
    %533 = vmatprep.subr.mxu0 0.0
    %534 = vmatpush1.msra.mxu0 0.0
    %535 = vmatprep.subr.mxu0 0.0
    %536 = vmatpush1.msra.mxu0 0.0
    %537 = vmatprep.subr.mxu0 0.0
    %538 = vmatpush1.msra.mxu0 0.0
    %539 = vmatprep.subr.mxu0 0.0
    %540 = vmatpush1.msra.mxu0 0.0
    %541 = vmatprep.subr.mxu0 0.0
    %542 = vmatpush1.msra.mxu0 0.0
    %543 = vmatprep.subr.mxu0 0.0
    %544 = vmatpush1.msra.mxu0 0.0
    %545 = vmatprep.subr.mxu0 0.0
    %546 = vmatpush1.msra.mxu0 0.0
    %547 = vmatprep.subr.mxu0 0.0
    %548 = vmatpush1.msra.mxu0 0.0
    %549 = vmatprep.mubr.f32.mxu0 0.0
    %550 = vmatmul.mubr.f32.gmra.mrb[0].mxu0 %v273
    %v551 = vpop.f32.mrb[0].mxu0
    %v552 = vadd.f32 %v482, %v551
    %v553 = vpop.f32.mrb[0].mxu0
    %554 = vdwg.mxu0
    %s555 = sld [smem:[#allocation2]]
    %vm556 = vcmp.gt.f32.partialorder %v552, 0.0
    %v557 = vstv %s555
    %v558 = vmul.f32 %v557, %v552
    %v559 = vsel %vm556, %v552, %v558
    %v560 = vld [vmem:[#allocation6] sm:$0xff]
    %v561 = vld [vmem:[#allocation6 + $0x8] sm:$0xff]
    %v562 = vld [vmem:[#allocation6 + $0x10] sm:$0xff]
    %v563 = vld [vmem:[#allocation6 + $0x18] sm:$0xff]
    %v564 = vld [vmem:[#allocation6 + $0x20] sm:$0xff]
    %v565 = vld [vmem:[#allocation6 + $0x28] sm:$0xff]
    %v566 = vld [vmem:[#allocation6 + $0x30] sm:$0xff]
    %v567 = vld [vmem:[#allocation6 + $0x38] sm:$0xff]
    %v568 = vld [vmem:[#allocation6 + $0x40] sm:$0xff]
    %v569 = vld [vmem:[#allocation6 + $0x48] sm:$0xff]
    %v570 = vld [vmem:[#allocation6 + $0x50] sm:$0xff]
    %v571 = vld [vmem:[#allocation6 + $0x58] sm:$0xff]
    %v572 = vld [vmem:[#allocation6 + $0x60] sm:$0xff]
    %v573 = vld [vmem:[#allocation6 + $0x68] sm:$0xff]
    %v574 = vld [vmem:[#allocation6 + $0x70] sm:$0xff]
    %v575 = vld [vmem:[#allocation6 + $0x78] sm:$0xff]
    %v576 = vld [vmem:[%s5] sm:$0x1]
    %v578 = vlaneseq
    %v579 = vshrl.u32 %v578, 7
    %v580 = vsub.s32 0, %v579
    %v581 = vrot.slane %v576, %v580
    %583 = vmatprep.subr.mxu0 0.0
    %584 = vmatpush1.msra.mxu0 %v560
    %585 = vmatprep.subr.mxu0 0.0
    %586 = vmatpush1.msra.mxu0 %v561
    %587 = vmatprep.subr.mxu0 0.0
    %588 = vmatpush1.msra.mxu0 %v562
    %589 = vmatprep.subr.mxu0 0.0
    %590 = vmatpush1.msra.mxu0 %v563
    %591 = vmatprep.subr.mxu0 0.0
    %592 = vmatpush1.msra.mxu0 %v564
    %593 = vmatprep.subr.mxu0 0.0
    %594 = vmatpush1.msra.mxu0 %v565
    %595 = vmatprep.subr.mxu0 0.0
    %596 = vmatpush1.msra.mxu0 %v566
    %597 = vmatprep.subr.mxu0 0.0
    %598 = vmatpush1.msra.mxu0 %v567
    %599 = vmatprep.subr.mxu0 0.0
    %600 = vmatpush1.msra.mxu0 %v568
    %601 = vmatprep.subr.mxu0 0.0
    %602 = vmatpush1.msra.mxu0 %v569
    %603 = vmatprep.subr.mxu0 0.0
    %604 = vmatpush1.msra.mxu0 %v570
    %605 = vmatprep.subr.mxu0 0.0
    %606 = vmatpush1.msra.mxu0 %v571
    %607 = vmatprep.subr.mxu0 0.0
    %608 = vmatpush1.msra.mxu0 %v572
    %609 = vmatprep.subr.mxu0 0.0
    %610 = vmatpush1.msra.mxu0 %v573
    %611 = vmatprep.subr.mxu0 0.0
    %612 = vmatpush1.msra.mxu0 %v574
    %613 = vmatprep.subr.mxu0 0.0
    %614 = vmatpush1.msra.mxu0 %v575
    %615 = vmatprep.subr.mxu0 0.0
    %616 = vmatpush1.msra.mxu0 0.0
    %617 = vmatprep.subr.mxu0 0.0
    %618 = vmatpush1.msra.mxu0 0.0
    %619 = vmatprep.subr.mxu0 0.0
    %620 = vmatpush1.msra.mxu0 0.0
    %621 = vmatprep.subr.mxu0 0.0
    %622 = vmatpush1.msra.mxu0 0.0
    %623 = vmatprep.subr.mxu0 0.0
    %624 = vmatpush1.msra.mxu0 0.0
    %625 = vmatprep.subr.mxu0 0.0
    %626 = vmatpush1.msra.mxu0 0.0
    %627 = vmatprep.subr.mxu0 0.0
    %628 = vmatpush1.msra.mxu0 0.0
    %629 = vmatprep.subr.mxu0 0.0
    %630 = vmatpush1.msra.mxu0 0.0
    %631 = vmatprep.subr.mxu0 0.0
    %632 = vmatpush1.msra.mxu0 0.0
    %633 = vmatprep.subr.mxu0 0.0
    %634 = vmatpush1.msra.mxu0 0.0
    %635 = vmatprep.subr.mxu0 0.0
    %636 = vmatpush1.msra.mxu0 0.0
    %637 = vmatprep.subr.mxu0 0.0
    %638 = vmatpush1.msra.mxu0 0.0
    %639 = vmatprep.subr.mxu0 0.0
    %640 = vmatpush1.msra.mxu0 0.0
    %641 = vmatprep.subr.mxu0 0.0
    %642 = vmatpush1.msra.mxu0 0.0
    %643 = vmatprep.subr.mxu0 0.0
    %644 = vmatpush1.msra.mxu0 0.0
    %645 = vmatprep.subr.mxu0 0.0
    %646 = vmatpush1.msra.mxu0 0.0
    %647 = vmatprep.mubr.f32.mxu0 0.0
    %648 = vmatmul.mubr.f32.gmra.mrb[0].mxu0 %v559
    %v649 = vpop.f32.mrb[0].mxu0
    %v650 = vadd.f32 %v581, %v649
    %v651 = vpop.f32.mrb[0].mxu0
    %652 = vdwg.mxu0
    %653 = vst [vmem:[#allocation8] sm:$0x3] %v650
    // Predicated region
    $region38: #{forward.1} parent=1 // pred_check
      _
    $region39: #{forward.1} parent=1 // pred_check_branch
      %655 = sbr.rel (0) target = $region41
    $region40: #{forward.1} parent=1 // pred_region
      %s657 = ssub.s32 32, 32
      %658 = vsyncadd [#allocation5], %s657
      %s660 = sshll.u32 [#allocation8], 4
      %s661 = int_to_ptr.vmem [resolvable:$true] %s660
      %663 = dma.vmem_to_hbm [thread:$0]  %s661, 32, %s7, [#allocation5]
    $region41: #{forward.1} parent=1 // pred_fallthru
      _
    // Predicated region
    $region42: #{forward.1} parent=1 // pred_check
      _
    $region43: #{forward.1} parent=1 // pred_check_branch
      %665 = sbr.rel (0) target = $region45
    $region44: #{forward.1} parent=1 // pred_region
      %666 = dma.done [#allocation5], 32
    $region45: #{forward.1} parent=1 // pred_fallthru
      _
    %667 = vsyncpa [#allocation4], 1
    %668 = vsyncpa [#allocation7], 1
    %669 = vsyncpa [#allocation5], 1

</llo_original>
